<compile_context>
chip_gen: v7x
topology: tpu7x:2x2x1
jax: 0.10.0
libtpu: 0.0.40
codegen_flags: <defaults>
</compile_context>

<pallas_src>
import functools

import jax
import jax.numpy as jnp
from jax.experimental import pallas as pl
from jax.experimental.pallas import tpu as pltpu


def _vq_kernel(n_valid, masked,
               x_ref, emb_ref, embt_ref, esq_ref,
               q_ref, counts_ref, sqerr_ref):
    i = pl.program_id(0)
    tn = x_ref.shape[0]

    x = x_ref[...].astype(jnp.float32)        # (tn, Dp)
    embt = embt_ref[...]                      # (Dp, Mp)  f32, resident
    e_sq = esq_ref[...]                       # (1,  Mp)  f32, resident

    # score = 2 x.e - ||e||^2 ; argmax(score) == argmin(||x - e||^2).
    xe = jnp.dot(x, embt, preferred_element_type=jnp.float32)   # (tn, Mp) MXU
    score = 2.0 * xe - e_sq                                     # (tn, Mp)

    mp = score.shape[1]
    col = jax.lax.broadcasted_iota(jnp.int32, score.shape, 1)
    max_s = jnp.max(score, axis=-1, keepdims=True)
    idx = jnp.min(jnp.where(score == max_s, col, mp), axis=-1, keepdims=True)
    onehot = (col == idx).astype(jnp.float32)                   # (tn, Mp)

    # quantized = F.embedding(indices, embedding) == one_hot @ embedding
    emb = emb_ref[...]                                          # (Mp, Dp) f32
    q = jnp.dot(onehot, emb, preferred_element_type=jnp.float32)  # (tn, Dp)
    q_ref[...] = q.astype(q_ref.dtype)

    if masked:
        # mask out zero-padded rows from the statistics
        row = jax.lax.broadcasted_iota(jnp.int32, (tn, 1), 0) + i * tn
        valid = (row < n_valid).astype(jnp.float32)             # (tn, 1)
        onehot_c = onehot * valid
        diff = (x - q) * valid
    else:
        onehot_c = onehot
        diff = x - q

    # per-block partial results (reduced in the wrapper)
    counts_ref[...] = jnp.sum(onehot_c, axis=0).reshape(1, 1, -1)   # (1,1,Mp)
    sqerr_ref[...] = jnp.sum(diff * diff, axis=0).reshape(1, 1, -1)  # (1,1,Dp)


def _round_up(a, b):
    return (a + b - 1) // b * b


@functools.partial(jax.jit, static_argnames=("commitment_cost",))
def vq_embedding_ema_forward(x, embedding, commitment_cost=0.25):
    """Eval-mode forward of VQEmbeddingEMA.

    Returns (quantized, commitment_loss, codebook_loss, perplexity),
    matching the PyTorch module with self.training == False.
    """
    *lead, D = x.shape
    M, D_e = embedding.shape
    assert D == D_e
    N = 1
    for s in lead:
        N *= s

    LANE = 128
    D_pad = _round_up(D, LANE)
    M_pad = _round_up(M, LANE)

    # ---- per-generation VMEM budget & tile selection -------------------------
    try:
        info = pltpu.get_tpu_info()
        vmem_cap = int(getattr(info, "vmem_capacity_bytes", 64 * 1024 * 1024))
    except Exception:
        vmem_cap = 64 * 1024 * 1024          # conservative (v7x per-TC)
    budget = vmem_cap // 2
    itemsize = jnp.dtype(x.dtype).itemsize

    def vmem_est(tn_):
        io = 2 * tn_ * D_pad * itemsize * 2          # x + q tiles, double-buffered
        code = 2 * 2 * M_pad * D_pad * 4             # emb + emb_t residents
        inter = 3 * tn_ * M_pad * 4                  # xe/score/onehot temporaries
        small = (M_pad + D_pad) * 4 * 4
        return io + code + inter + small

    tn = 8
    for cand in (4096, 2048, 1024, 512, 256, 128, 64, 32, 16, 8):
        if vmem_est(cand) <= budget:
            tn = cand
            break
    tn = min(tn, _round_up(N, 8))                    # don't over-tile tiny inputs
    N_pad = _round_up(N, tn)
    grid = N_pad // tn
    masked = N_pad != N

    # ---- host-side (wrapper) prep: padding + loop-invariant codebook work ----
    x_flat = x.reshape(N, D)
    x_p = jnp.pad(x_flat, ((0, N_pad - N), (0, D_pad - D)))
    emb_f32 = embedding.astype(jnp.float32)
    emb_p = jnp.pad(emb_f32, ((0, M_pad - M), (0, D_pad - D)))   # (Mp, Dp)
    emb_t = emb_p.T                                              # (Dp, Mp)
    e_sq = jnp.sum(emb_p * emb_p, axis=1)                        # (Mp,)
    # padded codes must never win the argmax
    e_sq = jnp.where(jnp.arange(M_pad) < M, e_sq, jnp.float32(1e30))[None, :]

    kernel = functools.partial(_vq_kernel, N, masked)

    cost = pl.CostEstimate(
        flops=2 * 2 * N_pad * M_pad * D_pad,                     # two MXU matmuls
        transcendentals=0,
        bytes_accessed=N_pad * D_pad * itemsize * 2
        + 2 * M_pad * D_pad * 4
        + grid * (M_pad + D_pad) * 4,
    )

    q_p, counts_b, sqerr_b = pl.pallas_call(
        kernel,
        out_shape=(
            jax.ShapeDtypeStruct((N_pad, D_pad), x.dtype),
            jax.ShapeDtypeStruct((grid, 1, M_pad), jnp.float32),
            jax.ShapeDtypeStruct((grid, 1, D_pad), jnp.float32),
        ),
        grid_spec=pltpu.PrefetchScalarGridSpec(
            num_scalar_prefetch=0,
            grid=(grid,),
            in_specs=[
                pl.BlockSpec((tn, D_pad), lambda i: (i, 0)),      # x tile
                pl.BlockSpec((M_pad, D_pad), lambda i: (0, 0)),   # codebook (resident)
                pl.BlockSpec((D_pad, M_pad), lambda i: (0, 0)),   # codebook^T (resident)
                pl.BlockSpec((1, M_pad), lambda i: (0, 0)),       # ||e||^2 (resident)
            ],
            out_specs=[
                pl.BlockSpec((tn, D_pad), lambda i: (i, 0)),      # quantized tile
                pl.BlockSpec((1, 1, M_pad), lambda i: (i, 0, 0)),  # per-block counts
                pl.BlockSpec((1, 1, D_pad), lambda i: (i, 0, 0)),  # per-block sqerr
            ],
        ),
        compiler_params=pltpu.CompilerParams(
            dimension_semantics=("parallel",),
            vmem_limit_bytes=int(min(vmem_cap * 3 // 4, 128 * 1024 * 1024)),
        ),
        cost_estimate=cost,
    )(x_p, emb_p, emb_t, e_sq)

    quantized = q_p[:N, :D].reshape(x.shape)

    # reductions of per-block partials (tiny; done by XLA)
    counts = jnp.sum(counts_b, axis=(0, 1))[:M]                  # (M,)
    sqerr = jnp.sum(sqerr_b)                                     # scalar

    # F.mse_loss(x.detach(), quantized) and F.mse_loss(x, quantized.detach())
    # have the same forward value: mean squared error over all elements.
    mse = sqerr / jnp.float32(N * D)
    codebook_loss = mse
    e_latent_loss = mse
    commitment_loss = commitment_cost * e_latent_loss

    # straight-through estimator
    quantized_st = x + jax.lax.stop_gradient(quantized - x)

    avg_probs = counts / jnp.float32(N)
    perplexity = jnp.exp(-jnp.sum(avg_probs * jnp.log(avg_probs + 1e-10)))

    return quantized_st, commitment_loss, codebook_loss, perplexity


if __name__ == "__main__":
    key = jax.random.PRNGKey(0)
    k_emb, k_x = jax.random.split(key)

    n_embeddings = 64
    embedding_dim = 32
    B, H, W = 2, 8, 8

    # embedding.uniform_(-1/M, 1/M), deterministic init
    init_bound = 1.0 / n_embeddings
    embedding = jax.random.uniform(
        k_emb, (n_embeddings, embedding_dim), jnp.float32,
        minval=-init_bound, maxval=init_bound)

    x = jax.random.normal(k_x, (B, H, W, embedding_dim), jnp.float32)

    quantized, commitment_loss, codebook_loss, perplexity = jax.block_until_ready(
        vq_embedding_ema_forward(x, embedding))

    assert quantized.shape == x.shape
    assert quantized.dtype == x.dtype
    assert commitment_loss.shape == ()
    assert codebook_loss.shape == ()
    assert perplexity.shape == ()

    print("KERNEL_OK")
</pallas_src>

<mosaic_0001>
module attributes {stable_mosaic.version = 11 : i64} {
  func.func @_vq_kernel(%arg0: i32, %arg1: memref<128x128xf32, #tpu.memory_space<vmem>>, %arg2: memref<128x128xf32, #tpu.memory_space<vmem>>, %arg3: memref<128x128xf32, #tpu.memory_space<vmem>>, %arg4: memref<1x128xf32, #tpu.memory_space<vmem>>, %arg5: memref<128x128xf32, #tpu.memory_space<vmem>>, %arg6: memref<1x1x128xf32, #tpu.memory_space<vmem>>, %arg7: memref<1x1x128xf32, #tpu.memory_space<vmem>>) attributes {dimension_semantics = [#tpu.dimension_semantics<parallel>], iteration_bounds = array<i64: 1>, scalar_prefetch = 0 : i64, scratch_operands = 0 : i64, tpu.core_type = #tpu.core_type<tc>, window_params = [{transform_indices = @transform_0, window_bounds = array<i64: 128, 128>}, {pipeline_mode = #tpu.pipeline_mode<synchronous>, transform_indices = @transform_1, window_bounds = array<i64: 128, 128>}, {pipeline_mode = #tpu.pipeline_mode<synchronous>, transform_indices = @transform_2, window_bounds = array<i64: 128, 128>}, {pipeline_mode = #tpu.pipeline_mode<synchronous>, transform_indices = @transform_3, window_bounds = array<i64: 1, 128>}, {transform_indices = @transform_4, window_bounds = array<i64: 128, 128>}, {transform_indices = @transform_5, window_bounds = array<i64: 1, 1, 128>}, {transform_indices = @transform_6, window_bounds = array<i64: 1, 1, 128>}]} {
    %c0 = arith.constant 0 : index
    %c0_0 = arith.constant 0 : index
    %0 = vector.load %arg1[%c0, %c0_0] : memref<128x128xf32, #tpu.memory_space<vmem>>, vector<128x128xf32>
    %c0_1 = arith.constant 0 : index
    %c0_2 = arith.constant 0 : index
    %1 = vector.load %arg3[%c0_1, %c0_2] : memref<128x128xf32, #tpu.memory_space<vmem>>, vector<128x128xf32>
    %c0_3 = arith.constant 0 : index
    %c0_4 = arith.constant 0 : index
    %2 = vector.load %arg4[%c0_3, %c0_4] : memref<1x128xf32, #tpu.memory_space<vmem>>, vector<1x128xf32>
    %cst = arith.constant dense<0.000000e+00> : vector<128x128xf32>
    %3 = tpu.matmul %0, %1, %cst {dimension_numbers = #tpu.dot_dimension_numbers<[1], [0], [0], [1], [0, 0, 1, 1], [], []>} : vector<128x128xf32>, vector<128x128xf32>, vector<128x128xf32> -> vector<128x128xf32>
    %cst_5 = arith.constant 2.000000e+00 : f32
    %4 = vector.broadcast %cst_5 : f32 to vector<128x128xf32>
    %5 = arith.mulf %4, %3 : vector<128x128xf32>
    %6 = vector.broadcast %2 : vector<1x128xf32> to vector<128x128xf32>
    %7 = arith.subf %5, %6 : vector<128x128xf32>
    %8 = tpu.iota {dimensions = array<i32: 1>} : vector<128x128xi32>
    %cst_6 = arith.constant dense<0xFF800000> : vector<128xf32>
    %9 = vector.multi_reduction <maximumf>, %7, %cst_6 [1] : vector<128x128xf32> to vector<128xf32>
    %10 = vector.shape_cast %9 : vector<128xf32> to vector<128x1xf32>
    %11 = vector.broadcast %10 : vector<128x1xf32> to vector<128x128xf32>
    %12 = arith.cmpf oeq, %7, %11 : vector<128x128xf32>
    %c128_i32 = arith.constant 128 : i32
    %13 = vector.broadcast %c128_i32 : i32 to vector<128x128xi32>
    %14 = arith.select %12, %8, %13 : vector<128x128xi1>, vector<128x128xi32>
    %cst_7 = arith.constant dense<2147483647> : vector<128xi32>
    %15 = vector.multi_reduction <minsi>, %14, %cst_7 [1] : vector<128x128xi32> to vector<128xi32>
    %16 = vector.shape_cast %15 : vector<128xi32> to vector<128x1xi32>
    %17 = vector.broadcast %16 : vector<128x1xi32> to vector<128x128xi32>
    %18 = arith.cmpi eq, %8, %17 : vector<128x128xi32>
    %19 = arith.extui %18 : vector<128x128xi1> to vector<128x128xi32>
    %20 = arith.sitofp %19 : vector<128x128xi32> to vector<128x128xf32>
    %c0_8 = arith.constant 0 : index
    %c0_9 = arith.constant 0 : index
    %21 = vector.load %arg2[%c0_8, %c0_9] : memref<128x128xf32, #tpu.memory_space<vmem>>, vector<128x128xf32>
    %cst_10 = arith.constant dense<0.000000e+00> : vector<128x128xf32>
    %22 = tpu.matmul %20, %21, %cst_10 {dimension_numbers = #tpu.dot_dimension_numbers<[1], [0], [0], [1], [0, 0, 1, 1], [], []>} : vector<128x128xf32>, vector<128x128xf32>, vector<128x128xf32> -> vector<128x128xf32>
    %c0_11 = arith.constant 0 : index
    %c0_12 = arith.constant 0 : index
    %23 = vector.load %arg5[%c0_11, %c0_12] : memref<128x128xf32, #tpu.memory_space<vmem>>, vector<128x128xf32>
    tpu.vector_store %arg5[%c0_11, %c0_12], %22 {strides = array<i32>} : memref<128x128xf32, #tpu.memory_space<vmem>>, vector<128x128xf32>,
    %24 = arith.subf %0, %22 : vector<128x128xf32>
    %cst_13 = arith.constant dense<0.000000e+00> : vector<128xf32>
    %25 = vector.multi_reduction <add>, %20, %cst_13 [0] : vector<128x128xf32> to vector<128xf32>
    %26 = vector.shape_cast %25 : vector<128xf32> to vector<1x1x128xf32>
    %c0_14 = arith.constant 0 : index
    %c0_15 = arith.constant 0 : index
    %c0_16 = arith.constant 0 : index
    %27 = vector.load %arg6[%c0_14, %c0_15, %c0_16] : memref<1x1x128xf32, #tpu.memory_space<vmem>>, vector<1x1x128xf32>
    tpu.vector_store %arg6[%c0_14, %c0_15, %c0_16], %26 {strides = array<i32>} : memref<1x1x128xf32, #tpu.memory_space<vmem>>, vector<1x1x128xf32>,
    %28 = arith.mulf %24, %24 : vector<128x128xf32>
    %cst_17 = arith.constant dense<0.000000e+00> : vector<128xf32>
    %29 = vector.multi_reduction <add>, %28, %cst_17 [0] : vector<128x128xf32> to vector<128xf32>
    %30 = vector.shape_cast %29 : vector<128xf32> to vector<1x1x128xf32>
    %c0_18 = arith.constant 0 : index
    %c0_19 = arith.constant 0 : index
    %c0_20 = arith.constant 0 : index
    %31 = vector.load %arg7[%c0_18, %c0_19, %c0_20] : memref<1x1x128xf32, #tpu.memory_space<vmem>>, vector<1x1x128xf32>
    tpu.vector_store %arg7[%c0_18, %c0_19, %c0_20], %30 {strides = array<i32>} : memref<1x1x128xf32, #tpu.memory_space<vmem>>, vector<1x1x128xf32>,
    return
  }
  func.func @transform_0(%arg0: i32) -> (i32, i32) {
    %c0_i32 = arith.constant 0 : i32
    %c0_i32_0 = arith.constant 0 : i32
    return %arg0, %c0_i32 : i32, i32
  }
  func.func @transform_1(%arg0: i32) -> (i32, i32) {
    %c0_i32 = arith.constant 0 : i32
    %c0_i32_0 = arith.constant 0 : i32
    %c0_i32_1 = arith.constant 0 : i32
    return %c0_i32, %c0_i32_0 : i32, i32
  }
  func.func @transform_2(%arg0: i32) -> (i32, i32) {
    %c0_i32 = arith.constant 0 : i32
    %c0_i32_0 = arith.constant 0 : i32
    %c0_i32_1 = arith.constant 0 : i32
    return %c0_i32, %c0_i32_0 : i32, i32
  }
  func.func @transform_3(%arg0: i32) -> (i32, i32) {
    %c0_i32 = arith.constant 0 : i32
    %c0_i32_0 = arith.constant 0 : i32
    %c0_i32_1 = arith.constant 0 : i32
    return %c0_i32, %c0_i32_0 : i32, i32
  }
  func.func @transform_4(%arg0: i32) -> (i32, i32) {
    %c0_i32 = arith.constant 0 : i32
    %c0_i32_0 = arith.constant 0 : i32
    return %arg0, %c0_i32 : i32, i32
  }
  func.func @transform_5(%arg0: i32) -> (i32, i32, i32) {
    %c0_i32 = arith.constant 0 : i32
    %c0_i32_0 = arith.constant 0 : i32
    %c0_i32_1 = arith.constant 0 : i32
    return %arg0, %c0_i32, %c0_i32_0 : i32, i32, i32
  }
  func.func @transform_6(%arg0: i32) -> (i32, i32, i32) {
    %c0_i32 = arith.constant 0 : i32
    %c0_i32_0 = arith.constant 0 : i32
    %c0_i32_1 = arith.constant 0 : i32
    return %arg0, %c0_i32, %c0_i32_0 : i32, i32, i32
  }
}

</mosaic_0001>

<llo_original>
// kernel: vq_embedding_ema_forward.1
$region0: #{vq_embedding_ema_forward.1}
  #allocation0 [shape = 'u32[]', space=smem, size = 0x4, offset = 0x4, fixed_abs, tag = 'smem constant byte address 0x4 - core index']
  #allocation1 [shape = 'u32[144,128]{1,0:T(1,128)}', space=vmem, size = 0x12000, scoped, tag = 'internal scratch']
  %s0 = inlined_call_operand.vmem [shape: f32[128,128], index: 0, kind: input, shape index: {}]
  %s1 = inlined_call_operand.vmem [shape: f32[128,128], index: 1, kind: input, shape index: {}]
  %s2 = inlined_call_operand.vmem [shape: f32[128,128], index: 2, kind: input, shape index: {}]
  %s3 = inlined_call_operand.vmem [shape: f32[1,128], index: 3, kind: input, shape index: {}]
  %s4 = inlined_call_operand.vmem [shape: f32[128,128], index: 4, kind: output, shape index: {0}]
  %s5 = inlined_call_operand.vmem [shape: f32[1,1,128], index: 5, kind: output, shape index: {1}]
  %s6 = inlined_call_operand.vmem [shape: f32[1,1,128], index: 6, kind: output, shape index: {2}]
  %7 = xla_tuple %s4, %s5, %s6
  %s8 = sld [smem:[#allocation0]]
  $region42: #{vq_embedding_ema_forward.1} parent=0
    _
  %s10 = ssub.s32 1, %s8
  %s11 = scalar_select 0, %s10, %s8
  // Predicated region
  $region2: #{vq_embedding_ema_forward.1} parent=0 // pred_check
    _
  $region3: #{vq_embedding_ema_forward.1} parent=0 // pred_check_branch
    %13 = sbr.rel (0) target = $region5
  $region4: #{vq_embedding_ema_forward.1} parent=0 // pred_region
    _
  $region5: #{vq_embedding_ema_forward.1} parent=0 // pred_fallthru
    _
  // Predicated region
  $region6: #{vq_embedding_ema_forward.1} parent=0 // pred_check
    _
  $region7: #{vq_embedding_ema_forward.1} parent=0 // pred_check_branch
    %15 = sbr.rel (0) target = $region9
  $region8: #{vq_embedding_ema_forward.1} parent=0 // pred_region
    _
  $region9: #{vq_embedding_ema_forward.1} parent=0 // pred_fallthru
    _
  // Predicated region
  $region10: #{vq_embedding_ema_forward.1} parent=0 // pred_check
    _
  $region11: #{vq_embedding_ema_forward.1} parent=0 // pred_check_branch
    %17 = sbr.rel (0) target = $region13
  $region12: #{vq_embedding_ema_forward.1} parent=0 // pred_region
    _
  $region13: #{vq_embedding_ema_forward.1} parent=0 // pred_fallthru
    _
  // Predicated region
  $region14: #{vq_embedding_ema_forward.1} parent=0 // pred_check
    _
  $region15: #{vq_embedding_ema_forward.1} parent=0 // pred_check_branch
    %19 = sbr.rel (0) target = $region17
  $region16: #{vq_embedding_ema_forward.1} parent=0 // pred_region
    _
  $region17: #{vq_embedding_ema_forward.1} parent=0 // pred_fallthru
    _
  %v20 = vld [vmem:[%s0] sm:$0xff]
  %v21 = vld [vmem:[%s0 + $0x8] sm:$0xff]
  %v22 = vld [vmem:[%s0 + $0x10] sm:$0xff]
  %v23 = vld [vmem:[%s0 + $0x18] sm:$0xff]
  %v24 = vld [vmem:[%s0 + $0x20] sm:$0xff]
  %v25 = vld [vmem:[%s0 + $0x28] sm:$0xff]
  %v26 = vld [vmem:[%s0 + $0x30] sm:$0xff]
  %v27 = vld [vmem:[%s0 + $0x38] sm:$0xff]
  %v28 = vld [vmem:[%s0 + $0x40] sm:$0xff]
  %v29 = vld [vmem:[%s0 + $0x48] sm:$0xff]
  %v30 = vld [vmem:[%s0 + $0x50] sm:$0xff]
  %v31 = vld [vmem:[%s0 + $0x58] sm:$0xff]
  %v32 = vld [vmem:[%s0 + $0x60] sm:$0xff]
  %v33 = vld [vmem:[%s0 + $0x68] sm:$0xff]
  %v34 = vld [vmem:[%s0 + $0x70] sm:$0xff]
  %v35 = vld [vmem:[%s0 + $0x78] sm:$0xff]
  %v36 = vld [vmem:[%s2] sm:$0xff]
  %v37 = vld [vmem:[%s2 + $0x8] sm:$0xff]
  %v38 = vld [vmem:[%s2 + $0x10] sm:$0xff]
  %v39 = vld [vmem:[%s2 + $0x18] sm:$0xff]
  %v40 = vld [vmem:[%s2 + $0x20] sm:$0xff]
  %v41 = vld [vmem:[%s2 + $0x28] sm:$0xff]
  %v42 = vld [vmem:[%s2 + $0x30] sm:$0xff]
  %v43 = vld [vmem:[%s2 + $0x38] sm:$0xff]
  %v44 = vld [vmem:[%s2 + $0x40] sm:$0xff]
  %v45 = vld [vmem:[%s2 + $0x48] sm:$0xff]
  %v46 = vld [vmem:[%s2 + $0x50] sm:$0xff]
  %v47 = vld [vmem:[%s2 + $0x58] sm:$0xff]
  %v48 = vld [vmem:[%s2 + $0x60] sm:$0xff]
  %v49 = vld [vmem:[%s2 + $0x68] sm:$0xff]
  %v50 = vld [vmem:[%s2 + $0x70] sm:$0xff]
  %v51 = vld [vmem:[%s2 + $0x78] sm:$0xff]
  %v52 = vld [vmem:[%s3] sm:$0x1]
  %53 = vmatprep.subr.mxu0 0.0
  %54 = vmatpush1.msra.mxu0 %v36
  %55 = vmatprep.subr.mxu0 0.0
  %56 = vmatpush1.msra.mxu0 %v37
  %57 = vmatprep.subr.mxu0 0.0
  %58 = vmatpush1.msra.mxu0 %v38
  %59 = vmatprep.subr.mxu0 0.0
  %60 = vmatpush1.msra.mxu0 %v39
  %61 = vmatprep.subr.mxu0 0.0
  %62 = vmatpush1.msra.mxu0 %v40
  %63 = vmatprep.subr.mxu0 0.0
  %64 = vmatpush1.msra.mxu0 %v41
  %65 = vmatprep.subr.mxu0 0.0
  %66 = vmatpush1.msra.mxu0 %v42
  %67 = vmatprep.subr.mxu0 0.0
  %68 = vmatpush1.msra.mxu0 %v43
  %69 = vmatprep.subr.mxu0 0.0
  %70 = vmatpush1.msra.mxu0 %v44
  %71 = vmatprep.subr.mxu0 0.0
  %72 = vmatpush1.msra.mxu0 %v45
  %73 = vmatprep.subr.mxu0 0.0
  %74 = vmatpush1.msra.mxu0 %v46
  %75 = vmatprep.subr.mxu0 0.0
  %76 = vmatpush1.msra.mxu0 %v47
  %77 = vmatprep.subr.mxu0 0.0
  %78 = vmatpush1.msra.mxu0 %v48
  %79 = vmatprep.subr.mxu0 0.0
  %80 = vmatpush1.msra.mxu0 %v49
  %81 = vmatprep.subr.mxu0 0.0
  %82 = vmatpush1.msra.mxu0 %v50
  %83 = vmatprep.subr.mxu0 0.0
  %84 = vmatpush1.msra.mxu0 %v51
  %85 = vmatprep.subr.mxu0 0.0
  %86 = vmatpush1.msra.mxu0 0.0
  %87 = vmatprep.subr.mxu0 0.0
  %88 = vmatpush1.msra.mxu0 0.0
  %89 = vmatprep.subr.mxu0 0.0
  %90 = vmatpush1.msra.mxu0 0.0
  %91 = vmatprep.subr.mxu0 0.0
  %92 = vmatpush1.msra.mxu0 0.0
  %93 = vmatprep.subr.mxu0 0.0
  %94 = vmatpush1.msra.mxu0 0.0
  %95 = vmatprep.subr.mxu0 0.0
  %96 = vmatpush1.msra.mxu0 0.0
  %97 = vmatprep.subr.mxu0 0.0
  %98 = vmatpush1.msra.mxu0 0.0
  %99 = vmatprep.subr.mxu0 0.0
  %100 = vmatpush1.msra.mxu0 0.0
  %101 = vmatprep.subr.mxu0 0.0
  %102 = vmatpush1.msra.mxu0 0.0
  %103 = vmatprep.subr.mxu0 0.0
  %104 = vmatpush1.msra.mxu0 0.0
  %105 = vmatprep.subr.mxu0 0.0
  %106 = vmatpush1.msra.mxu0 0.0
  %107 = vmatprep.subr.mxu0 0.0
  %108 = vmatpush1.msra.mxu0 0.0
  %109 = vmatprep.subr.mxu0 0.0
  %110 = vmatpush1.msra.mxu0 0.0
  %111 = vmatprep.subr.mxu0 0.0
  %112 = vmatpush1.msra.mxu0 0.0
  %113 = vmatprep.subr.mxu0 0.0
  %114 = vmatpush1.msra.mxu0 0.0
  %115 = vmatprep.subr.mxu0 0.0
  %116 = vmatpush1.msra.mxu0 0.0
  %117 = vmatprep.mubr.f32.mxu0 0.0
  %118 = vmatmul.mubr.f32.gmra.mrb[0].mxu0 %v20
  %v119 = vpop.f32.mrb[0].mxu0
  %v120 = vadd.f32 0.0, %v119
  %v121 = vpop.f32.mrb[0].mxu0
  %122 = vmatprep.mubr.f32.mxu0 0.0
  %123 = vmatmul.mubr.f32.gmra.mrb[0].mxu0 %v21
  %v124 = vpop.f32.mrb[0].mxu0
  %v125 = vadd.f32 0.0, %v124
  %v126 = vpop.f32.mrb[0].mxu0
  %127 = vmatprep.mubr.f32.mxu0 0.0
  %128 = vmatmul.mubr.f32.gmra.mrb[0].mxu0 %v22
  %v129 = vpop.f32.mrb[0].mxu0
  %v130 = vadd.f32 0.0, %v129
  %v131 = vpop.f32.mrb[0].mxu0
  %132 = vmatprep.mubr.f32.mxu0 0.0
  %133 = vmatmul.mubr.f32.gmra.mrb[0].mxu0 %v23
  %v134 = vpop.f32.mrb[0].mxu0
  %v135 = vadd.f32 0.0, %v134
  %v136 = vpop.f32.mrb[0].mxu0
  %137 = vmatprep.mubr.f32.mxu0 0.0
  %138 = vmatmul.mubr.f32.gmra.mrb[0].mxu0 %v24
  %v139 = vpop.f32.mrb[0].mxu0
  %v140 = vadd.f32 0.0, %v139
  %v141 = vpop.f32.mrb[0].mxu0
  %142 = vmatprep.mubr.f32.mxu0 0.0
  %143 = vmatmul.mubr.f32.gmra.mrb[0].mxu0 %v25
  %v144 = vpop.f32.mrb[0].mxu0
  %v145 = vadd.f32 0.0, %v144
  %v146 = vpop.f32.mrb[0].mxu0
  %147 = vmatprep.mubr.f32.mxu0 0.0
  %148 = vmatmul.mubr.f32.gmra.mrb[0].mxu0 %v26
  %v149 = vpop.f32.mrb[0].mxu0
  %v150 = vadd.f32 0.0, %v149
  %v151 = vpop.f32.mrb[0].mxu0
  %152 = vmatprep.mubr.f32.mxu0 0.0
  %153 = vmatmul.mubr.f32.gmra.mrb[0].mxu0 %v27
  %v154 = vpop.f32.mrb[0].mxu0
  %v155 = vadd.f32 0.0, %v154
  %v156 = vpop.f32.mrb[0].mxu0
  %157 = vmatprep.mubr.f32.mxu0 0.0
  %158 = vmatmul.mubr.f32.gmra.mrb[0].mxu0 %v28
  %v159 = vpop.f32.mrb[0].mxu0
  %v160 = vadd.f32 0.0, %v159
  %v161 = vpop.f32.mrb[0].mxu0
  %162 = vmatprep.mubr.f32.mxu0 0.0
  %163 = vmatmul.mubr.f32.gmra.mrb[0].mxu0 %v29
  %v164 = vpop.f32.mrb[0].mxu0
  %v165 = vadd.f32 0.0, %v164
  %v166 = vpop.f32.mrb[0].mxu0
  %167 = vmatprep.mubr.f32.mxu0 0.0
  %168 = vmatmul.mubr.f32.gmra.mrb[0].mxu0 %v30
  %v169 = vpop.f32.mrb[0].mxu0
  %v170 = vadd.f32 0.0, %v169
  %v171 = vpop.f32.mrb[0].mxu0
  %172 = vmatprep.mubr.f32.mxu0 0.0
  %173 = vmatmul.mubr.f32.gmra.mrb[0].mxu0 %v31
  %v174 = vpop.f32.mrb[0].mxu0
  %v175 = vadd.f32 0.0, %v174
  %v176 = vpop.f32.mrb[0].mxu0
  %177 = vmatprep.mubr.f32.mxu0 0.0
  %178 = vmatmul.mubr.f32.gmra.mrb[0].mxu0 %v32
  %v179 = vpop.f32.mrb[0].mxu0
  %v180 = vadd.f32 0.0, %v179
  %v181 = vpop.f32.mrb[0].mxu0
  %182 = vmatprep.mubr.f32.mxu0 0.0
  %183 = vmatmul.mubr.f32.gmra.mrb[0].mxu0 %v33
  %v184 = vpop.f32.mrb[0].mxu0
  %v185 = vadd.f32 0.0, %v184
  %v186 = vpop.f32.mrb[0].mxu0
  %187 = vmatprep.mubr.f32.mxu0 0.0
  %188 = vmatmul.mubr.f32.gmra.mrb[0].mxu0 %v34
  %v189 = vpop.f32.mrb[0].mxu0
  %v190 = vadd.f32 0.0, %v189
  %v191 = vpop.f32.mrb[0].mxu0
  %192 = vmatprep.mubr.f32.mxu0 0.0
  %193 = vmatmul.mubr.f32.gmra.mrb[0].mxu0 %v35
  %v194 = vpop.f32.mrb[0].mxu0
  %v195 = vadd.f32 0.0, %v194
  %v196 = vpop.f32.mrb[0].mxu0
  %197 = vdwg.mxu0
  %v198 = vmul.f32 %v120, 2.0
  %v199 = vmul.f32 %v125, 2.0
  %v200 = vmul.f32 %v130, 2.0
  %v201 = vmul.f32 %v135, 2.0
  %v202 = vmul.f32 %v140, 2.0
  %v203 = vmul.f32 %v145, 2.0
  %v204 = vmul.f32 %v150, 2.0
  %v205 = vmul.f32 %v155, 2.0
  %v206 = vmul.f32 %v160, 2.0
  %v207 = vmul.f32 %v165, 2.0
  %v208 = vmul.f32 %v170, 2.0
  %v209 = vmul.f32 %v175, 2.0
  %v210 = vmul.f32 %v180, 2.0
  %v211 = vmul.f32 %v185, 2.0
  %v212 = vmul.f32 %v190, 2.0
  %v213 = vmul.f32 %v195, 2.0
  %v215 = vlaneseq
  %v216 = vshrl.u32 %v215, 7
  %v217 = vsub.s32 0, %v216
  %v218 = vrot.slane %v52, %v217
  %v220 = vsub.f32 %v198, %v218
  %v221 = vsub.f32 %v199, %v218
  %v222 = vsub.f32 %v200, %v218
  %v223 = vsub.f32 %v201, %v218
  %v224 = vsub.f32 %v202, %v218
  %v225 = vsub.f32 %v203, %v218
  %v226 = vsub.f32 %v204, %v218
  %v227 = vsub.f32 %v205, %v218
  %v228 = vsub.f32 %v206, %v218
  %v229 = vsub.f32 %v207, %v218
  %v230 = vsub.f32 %v208, %v218
  %v231 = vsub.f32 %v209, %v218
  %v232 = vsub.f32 %v210, %v218
  %v233 = vsub.f32 %v211, %v218
  %v234 = vsub.f32 %v212, %v218
  %v235 = vsub.f32 %v213, %v218
  %v236 = vlaneseq
  %v237 = vand.u32 %v236, 127
  %238 = vmax.xlane.f32.xlu0 %v220
  %v239 = vpop.xlane.xlu0 %238
  %240 = vmax.xlane.f32.xlu0 %v221
  %v241 = vpop.xlane.xlu0 %240
  %242 = vmax.xlane.f32.xlu0 %v222
  %v243 = vpop.xlane.xlu0 %242
  %244 = vmax.xlane.f32.xlu0 %v223
  %v245 = vpop.xlane.xlu0 %244
  %246 = vmax.xlane.f32.xlu0 %v224
  %v247 = vpop.xlane.xlu0 %246
  %248 = vmax.xlane.f32.xlu0 %v225
  %v249 = vpop.xlane.xlu0 %248
  %250 = vmax.xlane.f32.xlu0 %v226
  %v251 = vpop.xlane.xlu0 %250
  %252 = vmax.xlane.f32.xlu0 %v227
  %v253 = vpop.xlane.xlu0 %252
  %254 = vmax.xlane.f32.xlu0 %v228
  %v255 = vpop.xlane.xlu0 %254
  %256 = vmax.xlane.f32.xlu0 %v229
  %v257 = vpop.xlane.xlu0 %256
  %258 = vmax.xlane.f32.xlu0 %v230
  %v259 = vpop.xlane.xlu0 %258
  %260 = vmax.xlane.f32.xlu0 %v231
  %v261 = vpop.xlane.xlu0 %260
  %262 = vmax.xlane.f32.xlu0 %v232
  %v263 = vpop.xlane.xlu0 %262
  %264 = vmax.xlane.f32.xlu0 %v233
  %v265 = vpop.xlane.xlu0 %264
  %266 = vmax.xlane.f32.xlu0 %v234
  %v267 = vpop.xlane.xlu0 %266
  %268 = vmax.xlane.f32.xlu0 %v235
  %v269 = vpop.xlane.xlu0 %268
  %vm270 = vcmp.eq.f32.partialorder %v220, %v239
  %vm271 = vcmp.eq.f32.partialorder %v221, %v241
  %vm272 = vcmp.eq.f32.partialorder %v222, %v243
  %vm273 = vcmp.eq.f32.partialorder %v223, %v245
  %vm274 = vcmp.eq.f32.partialorder %v224, %v247
  %vm275 = vcmp.eq.f32.partialorder %v225, %v249
  %vm276 = vcmp.eq.f32.partialorder %v226, %v251
  %vm277 = vcmp.eq.f32.partialorder %v227, %v253
  %vm278 = vcmp.eq.f32.partialorder %v228, %v255
  %vm279 = vcmp.eq.f32.partialorder %v229, %v257
  %vm280 = vcmp.eq.f32.partialorder %v230, %v259
  %vm281 = vcmp.eq.f32.partialorder %v231, %v261
  %vm282 = vcmp.eq.f32.partialorder %v232, %v263
  %vm283 = vcmp.eq.f32.partialorder %v233, %v265
  %vm284 = vcmp.eq.f32.partialorder %v234, %v267
  %vm285 = vcmp.eq.f32.partialorder %v235, %v269
  %v286 = vsel %vm270, %v237, 128
  %v287 = vsel %vm271, %v237, 128
  %v288 = vsel %vm272, %v237, 128
  %v289 = vsel %vm273, %v237, 128
  %v290 = vsel %vm274, %v237, 128
  %v291 = vsel %vm275, %v237, 128
  %v292 = vsel %vm276, %v237, 128
  %v293 = vsel %vm277, %v237, 128
  %v294 = vsel %vm278, %v237, 128
  %v295 = vsel %vm279, %v237, 128
  %v296 = vsel %vm280, %v237, 128
  %v297 = vsel %vm281, %v237, 128
  %v298 = vsel %vm282, %v237, 128
  %v299 = vsel %vm283, %v237, 128
  %v300 = vsel %vm284, %v237, 128
  %v301 = vsel %vm285, %v237, 128
  %v302 = vand.u32 %v286, 65535
  %v303 = vshra.s32 %v286, 16
  %v304 = vcvt.s32.f32 %v302
  %v305 = vcvt.s32.f32 %v303
  %306 = vmin.xlane.f32.xlu0 %v305
  %v307 = vpop.xlane.xlu0 %306
  %vm308 = vcmp.eq.f32.partialorder %v305, %v307
  %v309 = vsel %vm308, %v304, inf
  %310 = vmin.xlane.f32.xlu0 %v309
  %v311 = vpop.xlane.xlu0 %310
  %v312 = vcvt.f32.s32 %v311
  %v313 = vcvt.f32.s32 %v307
  %v314 = vshll.u32 %v313, 16
  %v315 = vadd.s32 %v314, %v312
  %v316 = vand.u32 %v287, 65535
  %v317 = vshra.s32 %v287, 16
  %v318 = vcvt.s32.f32 %v316
  %v319 = vcvt.s32.f32 %v317
  %320 = vmin.xlane.f32.xlu0 %v319
  %v321 = vpop.xlane.xlu0 %320
  %vm322 = vcmp.eq.f32.partialorder %v319, %v321
  %v323 = vsel %vm322, %v318, inf
  %324 = vmin.xlane.f32.xlu0 %v323
  %v325 = vpop.xlane.xlu0 %324
  %v326 = vcvt.f32.s32 %v325
  %v327 = vcvt.f32.s32 %v321
  %v328 = vshll.u32 %v327, 16
  %v329 = vadd.s32 %v328, %v326
  %v330 = vand.u32 %v288, 65535
  %v331 = vshra.s32 %v288, 16
  %v332 = vcvt.s32.f32 %v330
  %v333 = vcvt.s32.f32 %v331
  %334 = vmin.xlane.f32.xlu0 %v333
  %v335 = vpop.xlane.xlu0 %334
  %vm336 = vcmp.eq.f32.partialorder %v333, %v335
  %v337 = vsel %vm336, %v332, inf
  %338 = vmin.xlane.f32.xlu0 %v337
  %v339 = vpop.xlane.xlu0 %338
  %v340 = vcvt.f32.s32 %v339
  %v341 = vcvt.f32.s32 %v335
  %v342 = vshll.u32 %v341, 16
  %v343 = vadd.s32 %v342, %v340
  %v344 = vand.u32 %v289, 65535
  %v345 = vshra.s32 %v289, 16
  %v346 = vcvt.s32.f32 %v344
  %v347 = vcvt.s32.f32 %v345
  %348 = vmin.xlane.f32.xlu0 %v347
  %v349 = vpop.xlane.xlu0 %348
  %vm350 = vcmp.eq.f32.partialorder %v347, %v349
  %v351 = vsel %vm350, %v346, inf
  %352 = vmin.xlane.f32.xlu0 %v351
  %v353 = vpop.xlane.xlu0 %352
  %v354 = vcvt.f32.s32 %v353
  %v355 = vcvt.f32.s32 %v349
  %v356 = vshll.u32 %v355, 16
  %v357 = vadd.s32 %v356, %v354
  %v358 = vand.u32 %v290, 65535
  %v359 = vshra.s32 %v290, 16
  %v360 = vcvt.s32.f32 %v358
  %v361 = vcvt.s32.f32 %v359
  %362 = vmin.xlane.f32.xlu0 %v361
  %v363 = vpop.xlane.xlu0 %362
  %vm364 = vcmp.eq.f32.partialorder %v361, %v363
  %v365 = vsel %vm364, %v360, inf
  %366 = vmin.xlane.f32.xlu0 %v365
  %v367 = vpop.xlane.xlu0 %366
  %v368 = vcvt.f32.s32 %v367
  %v369 = vcvt.f32.s32 %v363
  %v370 = vshll.u32 %v369, 16
  %v371 = vadd.s32 %v370, %v368
  %v372 = vand.u32 %v291, 65535
  %v373 = vshra.s32 %v291, 16
  %v374 = vcvt.s32.f32 %v372
  %v375 = vcvt.s32.f32 %v373
  %376 = vmin.xlane.f32.xlu0 %v375
  %v377 = vpop.xlane.xlu0 %376
  %vm378 = vcmp.eq.f32.partialorder %v375, %v377
  %v379 = vsel %vm378, %v374, inf
  %380 = vmin.xlane.f32.xlu0 %v379
  %v381 = vpop.xlane.xlu0 %380
  %v382 = vcvt.f32.s32 %v381
  %v383 = vcvt.f32.s32 %v377
  %v384 = vshll.u32 %v383, 16
  %v385 = vadd.s32 %v384, %v382
  %v386 = vand.u32 %v292, 65535
  %v387 = vshra.s32 %v292, 16
  %v388 = vcvt.s32.f32 %v386
  %v389 = vcvt.s32.f32 %v387
  %390 = vmin.xlane.f32.xlu0 %v389
  %v391 = vpop.xlane.xlu0 %390
  %vm392 = vcmp.eq.f32.partialorder %v389, %v391
  %v393 = vsel %vm392, %v388, inf
  %394 = vmin.xlane.f32.xlu0 %v393
  %v395 = vpop.xlane.xlu0 %394
  %v396 = vcvt.f32.s32 %v395
  %v397 = vcvt.f32.s32 %v391
  %v398 = vshll.u32 %v397, 16
  %v399 = vadd.s32 %v398, %v396
  %v400 = vand.u32 %v293, 65535
  %v401 = vshra.s32 %v293, 16
  %v402 = vcvt.s32.f32 %v400
  %v403 = vcvt.s32.f32 %v401
  %404 = vmin.xlane.f32.xlu0 %v403
  %v405 = vpop.xlane.xlu0 %404
  %vm406 = vcmp.eq.f32.partialorder %v403, %v405
  %v407 = vsel %vm406, %v402, inf
  %408 = vmin.xlane.f32.xlu0 %v407
  %v409 = vpop.xlane.xlu0 %408
  %v410 = vcvt.f32.s32 %v409
  %v411 = vcvt.f32.s32 %v405
  %v412 = vshll.u32 %v411, 16
  %v413 = vadd.s32 %v412, %v410
  %v414 = vand.u32 %v294, 65535
  %v415 = vshra.s32 %v294, 16
  %v416 = vcvt.s32.f32 %v414
  %v417 = vcvt.s32.f32 %v415
  %418 = vmin.xlane.f32.xlu0 %v417
  %v419 = vpop.xlane.xlu0 %418
  %vm420 = vcmp.eq.f32.partialorder %v417, %v419
  %v421 = vsel %vm420, %v416, inf
  %422 = vmin.xlane.f32.xlu0 %v421
  %v423 = vpop.xlane.xlu0 %422
  %v424 = vcvt.f32.s32 %v423
  %v425 = vcvt.f32.s32 %v419
  %v426 = vshll.u32 %v425, 16
  %v427 = vadd.s32 %v426, %v424
  %v428 = vand.u32 %v295, 65535
  %v429 = vshra.s32 %v295, 16
  %v430 = vcvt.s32.f32 %v428
  %v431 = vcvt.s32.f32 %v429
  %432 = vmin.xlane.f32.xlu0 %v431
  %v433 = vpop.xlane.xlu0 %432
  %vm434 = vcmp.eq.f32.partialorder %v431, %v433
  %v435 = vsel %vm434, %v430, inf
  %436 = vmin.xlane.f32.xlu0 %v435
  %v437 = vpop.xlane.xlu0 %436
  %v438 = vcvt.f32.s32 %v437
  %v439 = vcvt.f32.s32 %v433
  %v440 = vshll.u32 %v439, 16
  %v441 = vadd.s32 %v440, %v438
  %v442 = vand.u32 %v296, 65535
  %v443 = vshra.s32 %v296, 16
  %v444 = vcvt.s32.f32 %v442
  %v445 = vcvt.s32.f32 %v443
  %446 = vmin.xlane.f32.xlu0 %v445
  %v447 = vpop.xlane.xlu0 %446
  %vm448 = vcmp.eq.f32.partialorder %v445, %v447
  %v449 = vsel %vm448, %v444, inf
  %450 = vmin.xlane.f32.xlu0 %v449
  %v451 = vpop.xlane.xlu0 %450
  %v452 = vcvt.f32.s32 %v451
  %v453 = vcvt.f32.s32 %v447
  %v454 = vshll.u32 %v453, 16
  %v455 = vadd.s32 %v454, %v452
  %v456 = vand.u32 %v297, 65535
  %v457 = vshra.s32 %v297, 16
  %v458 = vcvt.s32.f32 %v456
  %v459 = vcvt.s32.f32 %v457
  %460 = vmin.xlane.f32.xlu0 %v459
  %v461 = vpop.xlane.xlu0 %460
  %vm462 = vcmp.eq.f32.partialorder %v459, %v461
  %v463 = vsel %vm462, %v458, inf
  %464 = vmin.xlane.f32.xlu0 %v463
  %v465 = vpop.xlane.xlu0 %464
  %v466 = vcvt.f32.s32 %v465
  %v467 = vcvt.f32.s32 %v461
  %v468 = vshll.u32 %v467, 16
  %v469 = vadd.s32 %v468, %v466
  %v470 = vand.u32 %v298, 65535
  %v471 = vshra.s32 %v298, 16
  %v472 = vcvt.s32.f32 %v470
  %v473 = vcvt.s32.f32 %v471
  %474 = vmin.xlane.f32.xlu0 %v473
  %v475 = vpop.xlane.xlu0 %474
  %vm476 = vcmp.eq.f32.partialorder %v473, %v475
  %v477 = vsel %vm476, %v472, inf
  %478 = vmin.xlane.f32.xlu0 %v477
  %v479 = vpop.xlane.xlu0 %478
  %v480 = vcvt.f32.s32 %v479
  %v481 = vcvt.f32.s32 %v475
  %v482 = vshll.u32 %v481, 16
  %v483 = vadd.s32 %v482, %v480
  %v484 = vand.u32 %v299, 65535
  %v485 = vshra.s32 %v299, 16
  %v486 = vcvt.s32.f32 %v484
  %v487 = vcvt.s32.f32 %v485
  %488 = vmin.xlane.f32.xlu0 %v487
  %v489 = vpop.xlane.xlu0 %488
  %vm490 = vcmp.eq.f32.partialorder %v487, %v489
  %v491 = vsel %vm490, %v486, inf
  %492 = vmin.xlane.f32.xlu0 %v491
  %v493 = vpop.xlane.xlu0 %492
  %v494 = vcvt.f32.s32 %v493
  %v495 = vcvt.f32.s32 %v489
  %v496 = vshll.u32 %v495, 16
  %v497 = vadd.s32 %v496, %v494
  %v498 = vand.u32 %v300, 65535
  %v499 = vshra.s32 %v300, 16
  %v500 = vcvt.s32.f32 %v498
  %v501 = vcvt.s32.f32 %v499
  %502 = vmin.xlane.f32.xlu0 %v501
  %v503 = vpop.xlane.xlu0 %502
  %vm504 = vcmp.eq.f32.partialorder %v501, %v503
  %v505 = vsel %vm504, %v500, inf
  %506 = vmin.xlane.f32.xlu0 %v505
  %v507 = vpop.xlane.xlu0 %506
  %v508 = vcvt.f32.s32 %v507
  %v509 = vcvt.f32.s32 %v503
  %v510 = vshll.u32 %v509, 16
  %v511 = vadd.s32 %v510, %v508
  %v512 = vand.u32 %v301, 65535
  %v513 = vshra.s32 %v301, 16
  %v514 = vcvt.s32.f32 %v512
  %v515 = vcvt.s32.f32 %v513
  %516 = vmin.xlane.f32.xlu0 %v515
  %v517 = vpop.xlane.xlu0 %516
  %vm518 = vcmp.eq.f32.partialorder %v515, %v517
  %v519 = vsel %vm518, %v514, inf
  %520 = vmin.xlane.f32.xlu0 %v519
  %v521 = vpop.xlane.xlu0 %520
  %v522 = vcvt.f32.s32 %v521
  %v523 = vcvt.f32.s32 %v517
  %v524 = vshll.u32 %v523, 16
  %v525 = vadd.s32 %v524, %v522
  %vm526 = vcmp.eq.s32.totalorder %v237, %v315
  %vm527 = vcmp.eq.s32.totalorder %v237, %v329
  %vm528 = vcmp.eq.s32.totalorder %v237, %v343
  %vm529 = vcmp.eq.s32.totalorder %v237, %v357
  %vm530 = vcmp.eq.s32.totalorder %v237, %v371
  %vm531 = vcmp.eq.s32.totalorder %v237, %v385
  %vm532 = vcmp.eq.s32.totalorder %v237, %v399
  %vm533 = vcmp.eq.s32.totalorder %v237, %v413
  %vm534 = vcmp.eq.s32.totalorder %v237, %v427
  %vm535 = vcmp.eq.s32.totalorder %v237, %v441
  %vm536 = vcmp.eq.s32.totalorder %v237, %v455
  %vm537 = vcmp.eq.s32.totalorder %v237, %v469
  %vm538 = vcmp.eq.s32.totalorder %v237, %v483
  %vm539 = vcmp.eq.s32.totalorder %v237, %v497
  %vm540 = vcmp.eq.s32.totalorder %v237, %v511
  %vm541 = vcmp.eq.s32.totalorder %v237, %v525
  %v542 = vsel %vm526, 1, 0
  %v543 = vsel %vm527, 1, 0
  %v544 = vsel %vm528, 1, 0
  %v545 = vsel %vm529, 1, 0
  %v546 = vsel %vm530, 1, 0
  %v547 = vsel %vm531, 1, 0
  %v548 = vsel %vm532, 1, 0
  %v549 = vsel %vm533, 1, 0
  %v550 = vsel %vm534, 1, 0
  %v551 = vsel %vm535, 1, 0
  %v552 = vsel %vm536, 1, 0
  %v553 = vsel %vm537, 1, 0
  %v554 = vsel %vm538, 1, 0
  %v555 = vsel %vm539, 1, 0
  %v556 = vsel %vm540, 1, 0
  %v557 = vsel %vm541, 1, 0
  %v558 = vcvt.s32.f32 %v542
  %v559 = vcvt.s32.f32 %v543
  %v560 = vcvt.s32.f32 %v544
  %v561 = vcvt.s32.f32 %v545
  %v562 = vcvt.s32.f32 %v546
  %v563 = vcvt.s32.f32 %v547
  %v564 = vcvt.s32.f32 %v548
  %v565 = vcvt.s32.f32 %v549
  %v566 = vcvt.s32.f32 %v550
  %v567 = vcvt.s32.f32 %v551
  %v568 = vcvt.s32.f32 %v552
  %v569 = vcvt.s32.f32 %v553
  %v570 = vcvt.s32.f32 %v554
  %v571 = vcvt.s32.f32 %v555
  %v572 = vcvt.s32.f32 %v556
  %v573 = vcvt.s32.f32 %v557
  %v574 = vld [vmem:[%s1] sm:$0xff]
  %v575 = vld [vmem:[%s1 + $0x8] sm:$0xff]
  %v576 = vld [vmem:[%s1 + $0x10] sm:$0xff]
  %v577 = vld [vmem:[%s1 + $0x18] sm:$0xff]
  %v578 = vld [vmem:[%s1 + $0x20] sm:$0xff]
  %v579 = vld [vmem:[%s1 + $0x28] sm:$0xff]
  %v580 = vld [vmem:[%s1 + $0x30] sm:$0xff]
  %v581 = vld [vmem:[%s1 + $0x38] sm:$0xff]
  %v582 = vld [vmem:[%s1 + $0x40] sm:$0xff]
  %v583 = vld [vmem:[%s1 + $0x48] sm:$0xff]
  %v584 = vld [vmem:[%s1 + $0x50] sm:$0xff]
  %v585 = vld [vmem:[%s1 + $0x58] sm:$0xff]
  %v586 = vld [vmem:[%s1 + $0x60] sm:$0xff]
  %v587 = vld [vmem:[%s1 + $0x68] sm:$0xff]
  %v588 = vld [vmem:[%s1 + $0x70] sm:$0xff]
  %v589 = vld [vmem:[%s1 + $0x78] sm:$0xff]
  %590 = vmatprep.subr.mxu0 0.0
  %591 = vmatpush1.msra.mxu0 %v574
  %592 = vmatprep.subr.mxu0 0.0
  %593 = vmatpush1.msra.mxu0 %v575
  %594 = vmatprep.subr.mxu0 0.0
  %595 = vmatpush1.msra.mxu0 %v576
  %596 = vmatprep.subr.mxu0 0.0
  %597 = vmatpush1.msra.mxu0 %v577
  %598 = vmatprep.subr.mxu0 0.0
  %599 = vmatpush1.msra.mxu0 %v578
  %600 = vmatprep.subr.mxu0 0.0
  %601 = vmatpush1.msra.mxu0 %v579
  %602 = vmatprep.subr.mxu0 0.0
  %603 = vmatpush1.msra.mxu0 %v580
  %604 = vmatprep.subr.mxu0 0.0
  %605 = vmatpush1.msra.mxu0 %v581
  %606 = vmatprep.subr.mxu0 0.0
  %607 = vmatpush1.msra.mxu0 %v582
  %608 = vmatprep.subr.mxu0 0.0
  %609 = vmatpush1.msra.mxu0 %v583
  %610 = vmatprep.subr.mxu0 0.0
  %611 = vmatpush1.msra.mxu0 %v584
  %612 = vmatprep.subr.mxu0 0.0
  %613 = vmatpush1.msra.mxu0 %v585
  %614 = vmatprep.subr.mxu0 0.0
  %615 = vmatpush1.msra.mxu0 %v586
  %616 = vmatprep.subr.mxu0 0.0
  %617 = vmatpush1.msra.mxu0 %v587
  %618 = vmatprep.subr.mxu0 0.0
  %619 = vmatpush1.msra.mxu0 %v588
  %620 = vmatprep.subr.mxu0 0.0
  %621 = vmatpush1.msra.mxu0 %v589
  %622 = vmatprep.subr.mxu0 0.0
  %623 = vmatpush1.msra.mxu0 0.0
  %624 = vmatprep.subr.mxu0 0.0
  %625 = vmatpush1.msra.mxu0 0.0
  %626 = vmatprep.subr.mxu0 0.0
  %627 = vmatpush1.msra.mxu0 0.0
  %628 = vmatprep.subr.mxu0 0.0
  %629 = vmatpush1.msra.mxu0 0.0
  %630 = vmatprep.subr.mxu0 0.0
  %631 = vmatpush1.msra.mxu0 0.0
  %632 = vmatprep.subr.mxu0 0.0
  %633 = vmatpush1.msra.mxu0 0.0
  %634 = vmatprep.subr.mxu0 0.0
  %635 = vmatpush1.msra.mxu0 0.0
  %636 = vmatprep.subr.mxu0 0.0
  %637 = vmatpush1.msra.mxu0 0.0
  %638 = vmatprep.subr.mxu0 0.0
  %639 = vmatpush1.msra.mxu0 0.0
  %640 = vmatprep.subr.mxu0 0.0
  %641 = vmatpush1.msra.mxu0 0.0
  %642 = vmatprep.subr.mxu0 0.0
  %643 = vmatpush1.msra.mxu0 0.0
  %644 = vmatprep.subr.mxu0 0.0
  %645 = vmatpush1.msra.mxu0 0.0
  %646 = vmatprep.subr.mxu0 0.0
  %647 = vmatpush1.msra.mxu0 0.0
  %648 = vmatprep.subr.mxu0 0.0
  %649 = vmatpush1.msra.mxu0 0.0
  %650 = vmatprep.subr.mxu0 0.0
  %651 = vmatpush1.msra.mxu0 0.0
  %652 = vmatprep.subr.mxu0 0.0
  %653 = vmatpush1.msra.mxu0 0.0
  %654 = vmatprep.mubr.f32.mxu0 0.0
  %655 = vmatmul.mubr.f32.gmra.mrb[0].mxu0 %v558
  %v656 = vpop.f32.mrb[0].mxu0
  %v657 = vadd.f32 0.0, %v656
  %v658 = vpop.f32.mrb[0].mxu0
  %659 = vmatprep.mubr.f32.mxu0 0.0
  %660 = vmatmul.mubr.f32.gmra.mrb[0].mxu0 %v559
  %v661 = vpop.f32.mrb[0].mxu0
  %v662 = vadd.f32 0.0, %v661
  %v663 = vpop.f32.mrb[0].mxu0
  %664 = vmatprep.mubr.f32.mxu0 0.0
  %665 = vmatmul.mubr.f32.gmra.mrb[0].mxu0 %v560
  %v666 = vpop.f32.mrb[0].mxu0
  %v667 = vadd.f32 0.0, %v666
  %v668 = vpop.f32.mrb[0].mxu0
  %669 = vmatprep.mubr.f32.mxu0 0.0
  %670 = vmatmul.mubr.f32.gmra.mrb[0].mxu0 %v561
  %v671 = vpop.f32.mrb[0].mxu0
  %v672 = vadd.f32 0.0, %v671
  %v673 = vpop.f32.mrb[0].mxu0
  %674 = vmatprep.mubr.f32.mxu0 0.0
  %675 = vmatmul.mubr.f32.gmra.mrb[0].mxu0 %v562
  %v676 = vpop.f32.mrb[0].mxu0
  %v677 = vadd.f32 0.0, %v676
  %v678 = vpop.f32.mrb[0].mxu0
  %679 = vmatprep.mubr.f32.mxu0 0.0
  %680 = vmatmul.mubr.f32.gmra.mrb[0].mxu0 %v563
  %v681 = vpop.f32.mrb[0].mxu0
  %v682 = vadd.f32 0.0, %v681
  %v683 = vpop.f32.mrb[0].mxu0
  %684 = vmatprep.mubr.f32.mxu0 0.0
  %685 = vmatmul.mubr.f32.gmra.mrb[0].mxu0 %v564
  %v686 = vpop.f32.mrb[0].mxu0
  %v687 = vadd.f32 0.0, %v686
  %v688 = vpop.f32.mrb[0].mxu0
  %689 = vmatprep.mubr.f32.mxu0 0.0
  %690 = vmatmul.mubr.f32.gmra.mrb[0].mxu0 %v565
  %v691 = vpop.f32.mrb[0].mxu0
  %v692 = vadd.f32 0.0, %v691
  %v693 = vpop.f32.mrb[0].mxu0
  %694 = vmatprep.mubr.f32.mxu0 0.0
  %695 = vmatmul.mubr.f32.gmra.mrb[0].mxu0 %v566
  %v696 = vpop.f32.mrb[0].mxu0
  %v697 = vadd.f32 0.0, %v696
  %v698 = vpop.f32.mrb[0].mxu0
  %699 = vmatprep.mubr.f32.mxu0 0.0
  %700 = vmatmul.mubr.f32.gmra.mrb[0].mxu0 %v567
  %v701 = vpop.f32.mrb[0].mxu0
  %v702 = vadd.f32 0.0, %v701
  %v703 = vpop.f32.mrb[0].mxu0
  %704 = vmatprep.mubr.f32.mxu0 0.0
  %705 = vmatmul.mubr.f32.gmra.mrb[0].mxu0 %v568
  %v706 = vpop.f32.mrb[0].mxu0
  %v707 = vadd.f32 0.0, %v706
  %v708 = vpop.f32.mrb[0].mxu0
  %709 = vmatprep.mubr.f32.mxu0 0.0
  %710 = vmatmul.mubr.f32.gmra.mrb[0].mxu0 %v569
  %v711 = vpop.f32.mrb[0].mxu0
  %v712 = vadd.f32 0.0, %v711
  %v713 = vpop.f32.mrb[0].mxu0
  %714 = vmatprep.mubr.f32.mxu0 0.0
  %715 = vmatmul.mubr.f32.gmra.mrb[0].mxu0 %v570
  %v716 = vpop.f32.mrb[0].mxu0
  %v717 = vadd.f32 0.0, %v716
  %v718 = vpop.f32.mrb[0].mxu0
  %719 = vmatprep.mubr.f32.mxu0 0.0
  %720 = vmatmul.mubr.f32.gmra.mrb[0].mxu0 %v571
  %v721 = vpop.f32.mrb[0].mxu0
  %v722 = vadd.f32 0.0, %v721
  %v723 = vpop.f32.mrb[0].mxu0
  %724 = vmatprep.mubr.f32.mxu0 0.0
  %725 = vmatmul.mubr.f32.gmra.mrb[0].mxu0 %v572
  %v726 = vpop.f32.mrb[0].mxu0
  %v727 = vadd.f32 0.0, %v726
  %v728 = vpop.f32.mrb[0].mxu0
  %729 = vmatprep.mubr.f32.mxu0 0.0
  %730 = vmatmul.mubr.f32.gmra.mrb[0].mxu0 %v573
  %v731 = vpop.f32.mrb[0].mxu0
  %v732 = vadd.f32 0.0, %v731
  %v733 = vpop.f32.mrb[0].mxu0
  %734 = vdwg.mxu0
  %735 = vst [vmem:[%s4] sm:$0xff] %v657
  %736 = vst [vmem:[%s4 + $0x8] sm:$0xff] %v662
  %737 = vst [vmem:[%s4 + $0x10] sm:$0xff] %v667
  %738 = vst [vmem:[%s4 + $0x18] sm:$0xff] %v672
  %739 = vst [vmem:[%s4 + $0x20] sm:$0xff] %v677
  %740 = vst [vmem:[%s4 + $0x28] sm:$0xff] %v682
  %741 = vst [vmem:[%s4 + $0x30] sm:$0xff] %v687
  %742 = vst [vmem:[%s4 + $0x38] sm:$0xff] %v692
  %743 = vst [vmem:[%s4 + $0x40] sm:$0xff] %v697
  %744 = vst [vmem:[%s4 + $0x48] sm:$0xff] %v702
  %745 = vst [vmem:[%s4 + $0x50] sm:$0xff] %v707
  %746 = vst [vmem:[%s4 + $0x58] sm:$0xff] %v712
  %747 = vst [vmem:[%s4 + $0x60] sm:$0xff] %v717
  %748 = vst [vmem:[%s4 + $0x68] sm:$0xff] %v722
  %749 = vst [vmem:[%s4 + $0x70] sm:$0xff] %v727
  %750 = vst [vmem:[%s4 + $0x78] sm:$0xff] %v732
  %v751 = vsub.f32 %v20, %v657
  %v752 = vsub.f32 %v21, %v662
  %v753 = vsub.f32 %v22, %v667
  %v754 = vsub.f32 %v23, %v672
  %v755 = vsub.f32 %v24, %v677
  %v756 = vsub.f32 %v25, %v682
  %v757 = vsub.f32 %v26, %v687
  %v758 = vsub.f32 %v27, %v692
  %v759 = vsub.f32 %v28, %v697
  %v760 = vsub.f32 %v29, %v702
  %v761 = vsub.f32 %v30, %v707
  %v762 = vsub.f32 %v31, %v712
  %v763 = vsub.f32 %v32, %v717
  %v764 = vsub.f32 %v33, %v722
  %v765 = vsub.f32 %v34, %v727
  %v766 = vsub.f32 %v35, %v732
  %v767 = vadd.f32 %v558, %v559
  %v768 = vadd.f32 %v767, %v560
  %v769 = vadd.f32 %v768, %v561
  %v770 = vadd.f32 %v769, %v562
  %v771 = vadd.f32 %v770, %v563
  %v772 = vadd.f32 %v771, %v564
  %v773 = vadd.f32 %v772, %v565
  %v774 = vadd.f32 %v773, %v566
  %v775 = vadd.f32 %v774, %v567
  %v776 = vadd.f32 %v775, %v568
  %v777 = vadd.f32 %v776, %v569
  %v778 = vadd.f32 %v777, %v570
  %v779 = vadd.f32 %v778, %v571
  %v780 = vadd.f32 %v779, %v572
  %v781 = vadd.f32 %v780, %v573
  %v782 = vrot.slane %v781, 4
  %v783 = vadd.f32 %v781, %v782
  %v784 = vrot.slane %v783, 2
  %v785 = vadd.f32 %v783, %v784
  %v786 = vrot.slane %v785, 1
  %v787 = vadd.f32 %v785, %v786
  %788 = vst [vmem:[%s5] sm:$0x1] %v787
  %v789 = vmul.f32 %v751, %v751
  %v790 = vmul.f32 %v752, %v752
  %v791 = vmul.f32 %v753, %v753
  %v792 = vmul.f32 %v754, %v754
  %v793 = vmul.f32 %v755, %v755
  %v794 = vmul.f32 %v756, %v756
  %v795 = vmul.f32 %v757, %v757
  %v796 = vmul.f32 %v758, %v758
  %v797 = vmul.f32 %v759, %v759
  %v798 = vmul.f32 %v760, %v760
  %v799 = vmul.f32 %v761, %v761
  %v800 = vmul.f32 %v762, %v762
  %v801 = vmul.f32 %v763, %v763
  %v802 = vmul.f32 %v764, %v764
  %v803 = vmul.f32 %v765, %v765
  %v804 = vmul.f32 %v766, %v766
  %v805 = vadd.f32 %v789, %v790
  %v806 = vadd.f32 %v805, %v791
  %v807 = vadd.f32 %v806, %v792
  %v808 = vadd.f32 %v807, %v793
  %v809 = vadd.f32 %v808, %v794
  %v810 = vadd.f32 %v809, %v795
  %v811 = vadd.f32 %v810, %v796
  %v812 = vadd.f32 %v811, %v797
  %v813 = vadd.f32 %v812, %v798
  %v814 = vadd.f32 %v813, %v799
  %v815 = vadd.f32 %v814, %v800
  %v816 = vadd.f32 %v815, %v801
  %v817 = vadd.f32 %v816, %v802
  %v818 = vadd.f32 %v817, %v803
  %v819 = vadd.f32 %v818, %v804
  %v820 = vrot.slane %v819, 4
  %v821 = vadd.f32 %v819, %v820
  %v822 = vrot.slane %v821, 2
  %v823 = vadd.f32 %v821, %v822
  %v824 = vrot.slane %v823, 1
  %v825 = vadd.f32 %v823, %v824
  %826 = vst [vmem:[%s6] sm:$0x1] %v825
  // Predicated region
  $region18: #{vq_embedding_ema_forward.1} parent=0 // pred_check
    _
  $region19: #{vq_embedding_ema_forward.1} parent=0 // pred_check_branch
    %828 = sbr.rel (0) target = $region21
  $region20: #{vq_embedding_ema_forward.1} parent=0 // pred_region
    _
  $region21: #{vq_embedding_ema_forward.1} parent=0 // pred_fallthru
    _
  // Predicated region
  $region22: #{vq_embedding_ema_forward.1} parent=0 // pred_check
    _
  $region23: #{vq_embedding_ema_forward.1} parent=0 // pred_check_branch
    %830 = sbr.rel (0) target = $region25
  $region24: #{vq_embedding_ema_forward.1} parent=0 // pred_region
    _
  $region25: #{vq_embedding_ema_forward.1} parent=0 // pred_fallthru
    _
  // Predicated region
  $region26: #{vq_embedding_ema_forward.1} parent=0 // pred_check
    _
  $region27: #{vq_embedding_ema_forward.1} parent=0 // pred_check_branch
    %832 = sbr.rel (0) target = $region29
  $region28: #{vq_embedding_ema_forward.1} parent=0 // pred_region
    _
  $region29: #{vq_embedding_ema_forward.1} parent=0 // pred_fallthru
    _
  // Predicated region
  $region30: #{vq_embedding_ema_forward.1} parent=0 // pred_check
    _
  $region31: #{vq_embedding_ema_forward.1} parent=0 // pred_check_branch
    %834 = sbr.rel (0) target = $region33
  $region32: #{vq_embedding_ema_forward.1} parent=0 // pred_region
    _
  $region33: #{vq_embedding_ema_forward.1} parent=0 // pred_fallthru
    _
  // Predicated region
  $region34: #{vq_embedding_ema_forward.1} parent=0 // pred_check
    _
  $region35: #{vq_embedding_ema_forward.1} parent=0 // pred_check_branch
    %836 = sbr.rel (0) target = $region37
  $region36: #{vq_embedding_ema_forward.1} parent=0 // pred_region
    _
  $region37: #{vq_embedding_ema_forward.1} parent=0 // pred_fallthru
    _
  // Predicated region
  $region38: #{vq_embedding_ema_forward.1} parent=0 // pred_check
    _
  $region39: #{vq_embedding_ema_forward.1} parent=0 // pred_check_branch
    %838 = sbr.rel (0) target = $region41
  $region40: #{vq_embedding_ema_forward.1} parent=0 // pred_region
    _
  $region41: #{vq_embedding_ema_forward.1} parent=0 // pred_fallthru
    _

</llo_original>
